<compile_context>
chip_gen: v7x
topology: tpu7x:2x2x1
jax: 0.10.0
libtpu: 0.0.40
codegen_flags: <defaults>
</compile_context>

<pallas_src>
import functools
import math

import jax
import jax.numpy as jnp
from jax.experimental import pallas as pl
from jax.experimental.pallas import tpu as pltpu


# ----------------------------------------------------------------------------- helpers
def _round_up(x, m):
    return ((x + m - 1) // m) * m


def _vmem_capacity_bytes():
    # Generation-aware: 128 MiB on v5e/v6e, 64 MiB per TensorCore on v7x.
    try:
        cap = int(pltpu.get_tpu_info().vmem_capacity_bytes)
        if cap > 0:
            return cap
    except Exception:
        pass
    return 64 * 1024 * 1024   # conservative fallback (v7x per-core VMEM)


def _vmem_limit_bytes(needed):
    # At least the 32 MiB scoped default, at most 7/8 of physical VMEM to leave
    # headroom for compiler-internal scratch.
    ceiling = (_vmem_capacity_bytes() * 7) // 8
    return int(min(max(2 * needed, 32 * 1024 * 1024), ceiling))


# ----------------------------------------------------------------------------- linear
def linear_kernel(x_ref, w_ref, b_ref, o_ref):
    # x_ref: (tm, d_in)  w_ref: (d_in, d_out)  b_ref: (1, d_out)  o_ref: (tm, d_out)
    acc = jnp.dot(x_ref[...], w_ref[...], preferred_element_type=jnp.float32)
    o_ref[...] = (acc + b_ref[...].astype(jnp.float32)).astype(o_ref.dtype)


def linear(x2, w, b, *, tm=512):
    """Row-tiled y = x2 @ w + b.   x2: (M, d_in), w: (d_in, d_out), b: (d_out,)."""
    M, d_in = x2.shape
    d_out = w.shape[1]

    # MXU-friendly row tile; a ragged last tile (if any) is handled by Pallas with a
    # masked store -- no jnp.pad HBM round-trip of the activations.
    tm_eff = min(tm, _round_up(M, 8))
    grid_m = pl.cdiv(M, tm_eff)
    b2 = b.reshape(1, d_out)

    itemsize = jnp.dtype(x2.dtype).itemsize
    needed = ((2 * tm_eff * (d_in + d_out) + 2 * (d_in * d_out + d_out)) * itemsize
              + 4 * tm_eff * d_out)                      # f32 accumulator

    return pl.pallas_call(
        linear_kernel,
        out_shape=jax.ShapeDtypeStruct((M, d_out), x2.dtype),
        grid_spec=pltpu.PrefetchScalarGridSpec(
            num_scalar_prefetch=0,
            grid=(grid_m,),
            in_specs=[
                pl.BlockSpec((tm_eff, d_in), lambda i: (i, 0)),   # activations (row tiles)
                pl.BlockSpec((d_in, d_out), lambda i: (0, 0)),    # weight (resident)
                pl.BlockSpec((1, d_out), lambda i: (0, 0)),       # bias (resident)
            ],
            out_specs=pl.BlockSpec((tm_eff, d_out), lambda i: (i, 0)),
        ),
        compiler_params=pltpu.CompilerParams(
            dimension_semantics=("parallel",),
            vmem_limit_bytes=_vmem_limit_bytes(needed),
        ),
    )(x2, w, b2)


# ----------------------------------------------------------------------------- attention
def _attention_body(q_ref, k_ref, v_ref, bias_ref, o_ref, *, h, d_k, scale):
    # q_ref: (1, Sq, h*d_k)   k_ref / v_ref: (1, Skv, h*d_k)
    # bias_ref: (1, Sq, Skv) additive f32 mask bias shared across heads, or None
    # o_ref: (1, Sq, h*d_k)   lane-dense output block
    q_all = q_ref[0] * scale        # fold 1/sqrt(d_k) into Q (Sq*d_model VPU muls)
    k_all = k_ref[0]
    v_all = v_ref[0]
    bias = None if bias_ref is None else bias_ref[0].astype(jnp.float32)

    outs = []
    for hi in range(h):             # all heads in one grid step, back-to-back MXU work
        lo = hi * d_k
        qh = q_all[:, lo:lo + d_k]                       # (Sq, d_k)
        kh = k_all[:, lo:lo + d_k]                       # (Skv, d_k)
        vh = v_all[:, lo:lo + d_k]                       # (Skv, d_k)

        # scores with f32 accumulation on the MXU (contraction over d, transposed RHS)
        s = jnp.einsum("qd,kd->qk", qh, kh, preferred_element_type=jnp.float32)
        if bias is not None:
            s = s + bias

        # numerically stable softmax; normalization deferred to the (Sq, d_k) output
        m = jnp.max(s, axis=-1, keepdims=True)
        p = jnp.exp(s - m)
        denom = jnp.sum(p, axis=-1, keepdims=True)
        o_un = jnp.dot(p.astype(vh.dtype), vh, preferred_element_type=jnp.float32)
        outs.append(o_un * pl.reciprocal(denom, approx=True))   # EUP vrcp (free slot)
        # dropout(p) == identity in eval mode

    # single lane-dense (Sq, h*d_k) store, heads already concatenated for Wo
    o_ref[0] = jnp.concatenate(outs, axis=-1).astype(o_ref.dtype)


def attention_kernel(q_ref, k_ref, v_ref, o_ref, *, h, d_k, scale):
    _attention_body(q_ref, k_ref, v_ref, None, o_ref, h=h, d_k=d_k, scale=scale)


def attention_kernel_masked(q_ref, k_ref, v_ref, bias_ref, o_ref, *, h, d_k, scale):
    _attention_body(q_ref, k_ref, v_ref, bias_ref, o_ref, h=h, d_k=d_k, scale=scale)


# ----------------------------------------------------------------------------- MHA
def multi_head_attention(query, key, value, params, *, h, mask=None, tm=512):
    """query/key/value: (B, S, d_model) -> (B, Sq, d_model).  Eval-mode forward."""
    wq, bq, wk, bk, wv, bv, wo, bo = params
    B, Sq, d_model = query.shape
    Skv = key.shape[1]
    assert d_model % h == 0
    d_k = d_model // h

    # ---- projections (fused where activations coincide; outputs consumed in place) ----
    if (query is key) and (key is value):
        # self-attention: single (d_model, 3*d_model) matmul
        w_qkv = jnp.concatenate([wq, wk, wv], axis=1)
        b_qkv = jnp.concatenate([bq, bk, bv], axis=0)
        qkv = linear(query.reshape(B * Sq, d_model), w_qkv, b_qkv, tm=tm)
        qkv = qkv.reshape(B, Sq, 3 * d_model)
        q_arr, k_arr, v_arr = qkv, qkv, qkv
        q_idx = lambda b: (b, 0, 0)
        k_idx = lambda b: (b, 0, 1)      # column-block offsets into the fused output
        v_idx = lambda b: (b, 0, 2)
    else:
        q_arr = linear(query.reshape(B * Sq, d_model), wq, bq, tm=tm).reshape(B, Sq, d_model)
        q_idx = lambda b: (b, 0, 0)
        if key is value:
            # shared K/V source (typical cross-attention): fuse K and V projections
            w_kv = jnp.concatenate([wk, wv], axis=1)
            b_kv = jnp.concatenate([bk, bv], axis=0)
            kv = linear(key.reshape(B * Skv, d_model), w_kv, b_kv, tm=tm)
            kv = kv.reshape(B, Skv, 2 * d_model)
            k_arr, v_arr = kv, kv
            k_idx = lambda b: (b, 0, 0)
            v_idx = lambda b: (b, 0, 1)
        else:
            k_arr = linear(key.reshape(B * Skv, d_model), wk, bk, tm=tm).reshape(B, Skv, d_model)
            v_arr = linear(value.reshape(B * Skv, d_model), wv, bv, tm=tm).reshape(B, Skv, d_model)
            k_idx = lambda b: (b, 0, 0)
            v_idx = lambda b: (b, 0, 0)

    # ---- attention: one grid step per batch computes all h heads (lane-dense output) ----
    scale = 1.0 / math.sqrt(d_k)
    in_specs = [
        pl.BlockSpec((1, Sq, d_model), q_idx),
        pl.BlockSpec((1, Skv, d_model), k_idx),
        pl.BlockSpec((1, Skv, d_model), v_idx),
    ]
    inputs = [q_arr, k_arr, v_arr]

    if mask is None:
        kernel = functools.partial(attention_kernel, h=h, d_k=d_k, scale=scale)
        bias_bytes = 0
    else:
        # additive mask bias shared over heads (== mask.unsqueeze(1) in torch)
        mask3 = jnp.broadcast_to(mask, (B, Sq, Skv))
        bias = jnp.where(mask3 == 0, jnp.float32(-1e9), jnp.float32(0.0))
        in_specs.append(pl.BlockSpec((1, Sq, Skv), lambda b: (b, 0, 0)))
        inputs.append(bias)
        kernel = functools.partial(attention_kernel_masked, h=h, d_k=d_k, scale=scale)
        bias_bytes = 4 * Sq * Skv

    itemsize = jnp.dtype(query.dtype).itemsize
    needed = (2 * ((2 * Sq * d_model + 2 * Skv * d_model) * itemsize + bias_bytes)
              + 4 * (Sq * d_model + Skv * d_model + 3 * Sq * Skv))   # f32 intermediates

    attn_out = pl.pallas_call(
        kernel,
        out_shape=jax.ShapeDtypeStruct((B, Sq, d_model), query.dtype),
        grid_spec=pltpu.PrefetchScalarGridSpec(
            num_scalar_prefetch=0,
            grid=(B,),
            in_specs=in_specs,
            out_specs=pl.BlockSpec((1, Sq, d_model), lambda b: (b, 0, 0)),
        ),
        compiler_params=pltpu.CompilerParams(
            dimension_semantics=("parallel",),
            vmem_limit_bytes=_vmem_limit_bytes(needed),
        ),
    )(*inputs)

    # heads already concatenated along the last dim -> free reshape, no transpose
    out = linear(attn_out.reshape(B * Sq, d_model), wo, bo, tm=tm)
    return out.reshape(B, Sq, d_model)


# ----------------------------------------------------------------------------- reference
def mha_reference(query, key, value, params, *, h, mask=None):
    wq, bq, wk, bk, wv, bv, wo, bo = params
    B, Sq, d_model = query.shape
    Skv = key.shape[1]
    d_k = d_model // h

    def proj(x, w, b, S):
        return (x @ w + b).reshape(B, S, h, d_k).transpose(0, 2, 1, 3)

    Q = proj(query, wq, bq, Sq)
    K = proj(key, wk, bk, Skv)
    V = proj(value, wv, bv, Skv)
    scores = jnp.einsum("bhqd,bhkd->bhqk", Q, K) / math.sqrt(d_k)
    if mask is not None:
        scores = jnp.where(mask[:, None, :, :] == 0, -1e9, scores)
    p = jax.nn.softmax(scores, axis=-1)
    x = jnp.einsum("bhqk,bhkd->bhqd", p, V)
    x = x.transpose(0, 2, 1, 3).reshape(B, Sq, d_model)
    return x @ wo + bo


# ----------------------------------------------------------------------------- demo
if __name__ == "__main__":
    # Small shapes consistent with the module: batch=2, seq=8, h=8 heads,
    # d_model=128 (lane-dense last dim; d_k = 16 per head).
    B, S, d_model, n_heads = 2, 8, 128, 8

    key0 = jax.random.PRNGKey(0)
    keys = jax.random.split(key0, 11)

    x = jax.random.normal(keys[0], (B, S, d_model), jnp.float32)
    key_in = jax.random.normal(keys[1], (B, S, d_model), jnp.float32)
    value = jax.random.normal(keys[2], (B, S, d_model), jnp.float32)

    # Deterministic nn.Linear-style init: uniform(-1/sqrt(fan_in), 1/sqrt(fan_in)),
    # weights stored as (in_features, out_features) so the hot path is x @ W.
    lim = 1.0 / math.sqrt(d_model)

    def make_linear(kw, kb):
        w = jax.random.uniform(kw, (d_model, d_model), jnp.float32, -lim, lim)
        b_ = jax.random.uniform(kb, (d_model,), jnp.float32, -lim, lim)
        return w, b_

    wq, bq = make_linear(keys[3], keys[4])
    wk, bk = make_linear(keys[5], keys[6])
    wv, bv = make_linear(keys[7], keys[8])
    wo, bo = make_linear(keys[9], keys[10])
    params = (wq, bq, wk, bk, wv, bv, wo, bo)

    # Padding-style mask: batch 1 hides the last two key positions.
    mask = jnp.ones((B, S, S), dtype=jnp.int32)
    mask = mask.at[1, :, S - 2:].set(0)

    # Self-attention, no mask -> fused QKV projection + no-bias attention kernel.
    # (tolerance 2e-3: pl.reciprocal(approx=True) trades ~1e-4-level precision)
    y0 = jax.block_until_ready(multi_head_attention(x, x, x, params, h=n_heads))
    y0_ref = mha_reference(x, x, x, params, h=n_heads)
    assert jnp.allclose(y0, y0_ref, atol=2e-3, rtol=2e-3), "mismatch vs reference (self-attn)"

    # Distinct q/k/v with a padding mask -> separate projections + masked kernel.
    y1 = jax.block_until_ready(
        multi_head_attention(x, key_in, value, params, h=n_heads, mask=mask))
    y1_ref = mha_reference(x, key_in, value, params, h=n_heads, mask=mask)
    assert jnp.allclose(y1, y1_ref, atol=2e-3, rtol=2e-3), "mismatch vs reference (masked)"

    print("KERNEL_OK")
</pallas_src>

<mosaic_0001>
module attributes {stable_mosaic.version = 11 : i64} {
  func.func @linear_kernel(%arg0: i32, %arg1: memref<16x128xf32, #tpu.memory_space<vmem>>, %arg2: memref<128x384xf32, #tpu.memory_space<vmem>>, %arg3: memref<1x384xf32, #tpu.memory_space<vmem>>, %arg4: memref<16x384xf32, #tpu.memory_space<vmem>>) attributes {dimension_semantics = [#tpu.dimension_semantics<parallel>], iteration_bounds = array<i64: 1>, scalar_prefetch = 0 : i64, scratch_operands = 0 : i64, tpu.core_type = #tpu.core_type<tc>, window_params = [{transform_indices = @transform_0, window_bounds = array<i64: 16, 128>}, {pipeline_mode = #tpu.pipeline_mode<synchronous>, transform_indices = @transform_1, window_bounds = array<i64: 128, 384>}, {pipeline_mode = #tpu.pipeline_mode<synchronous>, transform_indices = @transform_2, window_bounds = array<i64: 1, 384>}, {transform_indices = @transform_3, window_bounds = array<i64: 16, 384>}]} {
    %c0 = arith.constant 0 : index
    %c0_0 = arith.constant 0 : index
    %0 = vector.load %arg1[%c0, %c0_0] : memref<16x128xf32, #tpu.memory_space<vmem>>, vector<16x128xf32>
    %c0_1 = arith.constant 0 : index
    %c0_2 = arith.constant 0 : index
    %1 = vector.load %arg2[%c0_1, %c0_2] : memref<128x384xf32, #tpu.memory_space<vmem>>, vector<128x384xf32>
    %cst = arith.constant dense<0.000000e+00> : vector<16x384xf32>
    %2 = tpu.matmul %0, %1, %cst {dimension_numbers = #tpu.dot_dimension_numbers<[1], [0], [0], [1], [0, 0, 1, 1], [], []>} : vector<16x128xf32>, vector<128x384xf32>, vector<16x384xf32> -> vector<16x384xf32>
    %c0_3 = arith.constant 0 : index
    %c0_4 = arith.constant 0 : index
    %3 = vector.load %arg3[%c0_3, %c0_4] : memref<1x384xf32, #tpu.memory_space<vmem>>, vector<1x384xf32>
    %4 = vector.broadcast %3 : vector<1x384xf32> to vector<16x384xf32>
    %5 = arith.addf %2, %4 : vector<16x384xf32>
    %c0_5 = arith.constant 0 : index
    %c0_6 = arith.constant 0 : index
    %6 = vector.load %arg4[%c0_5, %c0_6] : memref<16x384xf32, #tpu.memory_space<vmem>>, vector<16x384xf32>
    tpu.vector_store %arg4[%c0_5, %c0_6], %5 {strides = array<i32>} : memref<16x384xf32, #tpu.memory_space<vmem>>, vector<16x384xf32>,
    return
  }
  func.func @transform_0(%arg0: i32) -> (i32, i32) {
    %c0_i32 = arith.constant 0 : i32
    %c0_i32_0 = arith.constant 0 : i32
    return %arg0, %c0_i32 : i32, i32
  }
  func.func @transform_1(%arg0: i32) -> (i32, i32) {
    %c0_i32 = arith.constant 0 : i32
    %c0_i32_0 = arith.constant 0 : i32
    %c0_i32_1 = arith.constant 0 : i32
    return %c0_i32, %c0_i32_0 : i32, i32
  }
  func.func @transform_2(%arg0: i32) -> (i32, i32) {
    %c0_i32 = arith.constant 0 : i32
    %c0_i32_0 = arith.constant 0 : i32
    %c0_i32_1 = arith.constant 0 : i32
    return %c0_i32, %c0_i32_0 : i32, i32
  }
  func.func @transform_3(%arg0: i32) -> (i32, i32) {
    %c0_i32 = arith.constant 0 : i32
    %c0_i32_0 = arith.constant 0 : i32
    return %arg0, %c0_i32 : i32, i32
  }
}

</mosaic_0001>

<llo_original>
// kernel: tpu_custom_call.1
$region0: #{tpu_custom_call.1}
  #allocation0 [shape = 'u32[]', space=smem, size = 0x4, offset = 0x4, fixed_abs, tag = 'smem constant byte address 0x4 - core index']
  #allocation1 [shape = 'u32[144,128]{1,0:T(1,128)}', space=vmem, size = 0x12000, scoped, tag = 'internal scratch']
  %s0 = inlined_call_operand.hbm [shape: f32[16,128], index: 0, kind: input, shape index: {}]
  %s1 = inlined_call_operand.hbm [shape: f32[128,384], index: 1, kind: input, shape index: {}]
  %s2 = inlined_call_operand.vmem [shape: f32[1,384], index: 2, kind: input, shape index: {}]
  %s3 = inlined_call_operand.hbm [shape: f32[16,384], index: 3, kind: output, shape index: {}]
  %s4 = sld [smem:[#allocation0]]
  $region30: #{tpu_custom_call.1} parent=0
    _
  %s6 = ssub.s32 1, %s4
  %s7 = scalar_select 0, %s6, %s4
  $region1: #{tpu_custom_call.1} parent=0
    #allocation2 [shape = 'u8[8192]{0}', space=vmem, size = 0x2000, scoped, tag = 'input window, operand 0, single buffered']
    #allocation3 [shape = 's32[1]{0}', space=sflag, size = 0x4, scoped, tag = 'scoped memory for tpu_custom_call.1']
    #allocation4 [shape = 's32[1]{0}', space=sflag, size = 0x4, scoped, tag = 'scoped memory for tpu_custom_call.1']
    #allocation5 [shape = 'u8[196608]{0}', space=vmem, size = 0x30000, scoped, tag = 'input window, operand 1, single buffered']
    #allocation6 [shape = 's32[1]{0}', space=sflag, size = 0x4, scoped, tag = 'scoped memory for tpu_custom_call.1']
    #allocation7 [shape = 'u8[24576]{0}', space=vmem, size = 0x6000, scoped, tag = 'output window, operand 0, single buffered']
    %8 = vsyncpa [#allocation3], 0
    %9 = vsyncpa [#allocation6], 0
    %10 = vsyncpa [#allocation4], 0
    // Predicated region
    $region2: #{tpu_custom_call.1} parent=1 // pred_check
      _
    $region3: #{tpu_custom_call.1} parent=1 // pred_check_branch
      %12 = sbr.rel (0) target = $region5
    $region4: #{tpu_custom_call.1} parent=1 // pred_region
      %s14 = ssub.s32 256, 256
      %15 = vsyncadd [#allocation3], %s14
      %s16 = sshll.u32 [#allocation2], 4
      %s17 = int_to_ptr.vmem [resolvable:$true] %s16
      %22 = dma.hbm_to_vmem [thread:$0]  %s0, 256, %s17, [#allocation3], 128, 128, 8
    $region5: #{tpu_custom_call.1} parent=1 // pred_fallthru
      _
    // Predicated region
    $region6: #{tpu_custom_call.1} parent=1 // pred_check
      _
    $region7: #{tpu_custom_call.1} parent=1 // pred_check_branch
      %24 = sbr.rel (0) target = $region9
    $region8: #{tpu_custom_call.1} parent=1 // pred_region
      %s26 = ssub.s32 6144, 6144
      %27 = vsyncadd [#allocation6], %s26
      %s28 = sshll.u32 [#allocation5], 4
      %s29 = int_to_ptr.vmem [resolvable:$true] %s28
      %34 = dma.hbm_to_vmem [thread:$0]  %s1, 6144, %s29, [#allocation6], 384, 384, 24
    $region9: #{tpu_custom_call.1} parent=1 // pred_fallthru
      _
    // Predicated region
    $region10: #{tpu_custom_call.1} parent=1 // pred_check
      _
    $region11: #{tpu_custom_call.1} parent=1 // pred_check_branch
      %36 = sbr.rel (0) target = $region13
    $region12: #{tpu_custom_call.1} parent=1 // pred_region
      _
    $region13: #{tpu_custom_call.1} parent=1 // pred_fallthru
      _
    // Predicated region
    $region14: #{tpu_custom_call.1} parent=1 // pred_check
      _
    $region15: #{tpu_custom_call.1} parent=1 // pred_check_branch
      %38 = sbr.rel (0) target = $region17
    $region16: #{tpu_custom_call.1} parent=1 // pred_region
      %39 = dma.done [#allocation3], 256
    $region17: #{tpu_custom_call.1} parent=1 // pred_fallthru
      _
    // Predicated region
    $region18: #{tpu_custom_call.1} parent=1 // pred_check
      _
    $region19: #{tpu_custom_call.1} parent=1 // pred_check_branch
      %41 = sbr.rel (0) target = $region21
    $region20: #{tpu_custom_call.1} parent=1 // pred_region
      %42 = dma.done [#allocation6], 6144
    $region21: #{tpu_custom_call.1} parent=1 // pred_fallthru
      _
    %v43 = vld [vmem:[#allocation2] sm:$0xff]
    %v44 = vld [vmem:[#allocation2 + $0x8] sm:$0xff]
    %v45 = vld [vmem:[#allocation5] sm:$0xff]
    %v46 = vld [vmem:[#allocation5 + $0x8] sm:$0xff]
    %v47 = vld [vmem:[#allocation5 + $0x10] sm:$0xff]
    %v48 = vld [vmem:[#allocation5 + $0x18] sm:$0xff]
    %v49 = vld [vmem:[#allocation5 + $0x20] sm:$0xff]
    %v50 = vld [vmem:[#allocation5 + $0x28] sm:$0xff]
    %v51 = vld [vmem:[#allocation5 + $0x30] sm:$0xff]
    %v52 = vld [vmem:[#allocation5 + $0x38] sm:$0xff]
    %v53 = vld [vmem:[#allocation5 + $0x40] sm:$0xff]
    %v54 = vld [vmem:[#allocation5 + $0x48] sm:$0xff]
    %v55 = vld [vmem:[#allocation5 + $0x50] sm:$0xff]
    %v56 = vld [vmem:[#allocation5 + $0x58] sm:$0xff]
    %v57 = vld [vmem:[#allocation5 + $0x60] sm:$0xff]
    %v58 = vld [vmem:[#allocation5 + $0x68] sm:$0xff]
    %v59 = vld [vmem:[#allocation5 + $0x70] sm:$0xff]
    %v60 = vld [vmem:[#allocation5 + $0x78] sm:$0xff]
    %v61 = vld [vmem:[#allocation5 + $0x80] sm:$0xff]
    %v62 = vld [vmem:[#allocation5 + $0x88] sm:$0xff]
    %v63 = vld [vmem:[#allocation5 + $0x90] sm:$0xff]
    %v64 = vld [vmem:[#allocation5 + $0x98] sm:$0xff]
    %v65 = vld [vmem:[#allocation5 + $0xa0] sm:$0xff]
    %v66 = vld [vmem:[#allocation5 + $0xa8] sm:$0xff]
    %v67 = vld [vmem:[#allocation5 + $0xb0] sm:$0xff]
    %v68 = vld [vmem:[#allocation5 + $0xb8] sm:$0xff]
    %v69 = vld [vmem:[#allocation5 + $0xc0] sm:$0xff]
    %v70 = vld [vmem:[#allocation5 + $0xc8] sm:$0xff]
    %v71 = vld [vmem:[#allocation5 + $0xd0] sm:$0xff]
    %v72 = vld [vmem:[#allocation5 + $0xd8] sm:$0xff]
    %v73 = vld [vmem:[#allocation5 + $0xe0] sm:$0xff]
    %v74 = vld [vmem:[#allocation5 + $0xe8] sm:$0xff]
    %v75 = vld [vmem:[#allocation5 + $0xf0] sm:$0xff]
    %v76 = vld [vmem:[#allocation5 + $0xf8] sm:$0xff]
    %v77 = vld [vmem:[#allocation5 + $0x100] sm:$0xff]
    %v78 = vld [vmem:[#allocation5 + $0x108] sm:$0xff]
    %v79 = vld [vmem:[#allocation5 + $0x110] sm:$0xff]
    %v80 = vld [vmem:[#allocation5 + $0x118] sm:$0xff]
    %v81 = vld [vmem:[#allocation5 + $0x120] sm:$0xff]
    %v82 = vld [vmem:[#allocation5 + $0x128] sm:$0xff]
    %v83 = vld [vmem:[#allocation5 + $0x130] sm:$0xff]
    %v84 = vld [vmem:[#allocation5 + $0x138] sm:$0xff]
    %v85 = vld [vmem:[#allocation5 + $0x140] sm:$0xff]
    %v86 = vld [vmem:[#allocation5 + $0x148] sm:$0xff]
    %v87 = vld [vmem:[#allocation5 + $0x150] sm:$0xff]
    %v88 = vld [vmem:[#allocation5 + $0x158] sm:$0xff]
    %v89 = vld [vmem:[#allocation5 + $0x160] sm:$0xff]
    %v90 = vld [vmem:[#allocation5 + $0x168] sm:$0xff]
    %v91 = vld [vmem:[#allocation5 + $0x170] sm:$0xff]
    %v92 = vld [vmem:[#allocation5 + $0x178] sm:$0xff]
    %v93 = vld [vmem:[%s2] sm:$0x7]
    %v95 = vlaneseq
    %v96 = vshrl.u32 %v95, 7
    %v97 = vsub.s32 0, %v96
    %v98 = vrot.slane %v93, %v97
    %v99 = vlaneseq
    %v100 = vshrl.u32 %v99, 7
    %v101 = vsub.s32 1, %v100
    %v102 = vrot.slane %v93, %v101
    %v103 = vlaneseq
    %v104 = vshrl.u32 %v103, 7
    %v105 = vsub.s32 2, %v104
    %v106 = vrot.slane %v93, %v105
    %110 = vmatprep.subr.mxu0 %v46
    %111 = vmatpush1.msra.mxu0 %v45
    %112 = vmatprep.subr.mxu0 %v49
    %113 = vmatpush1.msra.mxu0 %v48
    %114 = vmatprep.subr.mxu0 %v52
    %115 = vmatpush1.msra.mxu0 %v51
    %116 = vmatprep.subr.mxu0 %v55
    %117 = vmatpush1.msra.mxu0 %v54
    %118 = vmatprep.subr.mxu0 %v58
    %119 = vmatpush1.msra.mxu0 %v57
    %120 = vmatprep.subr.mxu0 %v61
    %121 = vmatpush1.msra.mxu0 %v60
    %122 = vmatprep.subr.mxu0 %v64
    %123 = vmatpush1.msra.mxu0 %v63
    %124 = vmatprep.subr.mxu0 %v67
    %125 = vmatpush1.msra.mxu0 %v66
    %126 = vmatprep.subr.mxu0 %v70
    %127 = vmatpush1.msra.mxu0 %v69
    %128 = vmatprep.subr.mxu0 %v73
    %129 = vmatpush1.msra.mxu0 %v72
    %130 = vmatprep.subr.mxu0 %v76
    %131 = vmatpush1.msra.mxu0 %v75
    %132 = vmatprep.subr.mxu0 %v79
    %133 = vmatpush1.msra.mxu0 %v78
    %134 = vmatprep.subr.mxu0 %v82
    %135 = vmatpush1.msra.mxu0 %v81
    %136 = vmatprep.subr.mxu0 %v85
    %137 = vmatpush1.msra.mxu0 %v84
    %138 = vmatprep.subr.mxu0 %v88
    %139 = vmatpush1.msra.mxu0 %v87
    %140 = vmatprep.subr.mxu0 %v91
    %141 = vmatpush1.msra.mxu0 %v90
    %142 = vmatprep.subr.mxu0 0.0
    %143 = vmatpush1.msra.mxu0 0.0
    %144 = vmatprep.subr.mxu0 0.0
    %145 = vmatpush1.msra.mxu0 0.0
    %146 = vmatprep.subr.mxu0 0.0
    %147 = vmatpush1.msra.mxu0 0.0
    %148 = vmatprep.subr.mxu0 0.0
    %149 = vmatpush1.msra.mxu0 0.0
    %150 = vmatprep.subr.mxu0 0.0
    %151 = vmatpush1.msra.mxu0 0.0
    %152 = vmatprep.subr.mxu0 0.0
    %153 = vmatpush1.msra.mxu0 0.0
    %154 = vmatprep.subr.mxu0 0.0
    %155 = vmatpush1.msra.mxu0 0.0
    %156 = vmatprep.subr.mxu0 0.0
    %157 = vmatpush1.msra.mxu0 0.0
    %158 = vmatprep.subr.mxu0 0.0
    %159 = vmatpush1.msra.mxu0 0.0
    %160 = vmatprep.subr.mxu0 0.0
    %161 = vmatpush1.msra.mxu0 0.0
    %162 = vmatprep.subr.mxu0 0.0
    %163 = vmatpush1.msra.mxu0 0.0
    %164 = vmatprep.subr.mxu0 0.0
    %165 = vmatpush1.msra.mxu0 0.0
    %166 = vmatprep.subr.mxu0 0.0
    %167 = vmatpush1.msra.mxu0 0.0
    %168 = vmatprep.subr.mxu0 0.0
    %169 = vmatpush1.msra.mxu0 0.0
    %170 = vmatprep.subr.mxu0 0.0
    %171 = vmatpush1.msra.mxu0 0.0
    %172 = vmatprep.subr.mxu0 0.0
    %173 = vmatpush1.msra.mxu0 0.0
    %174 = vmatprep.mubr.f32.mxu0 0.0
    %175 = vmatmul.mubr.f32.gmra.mrb[0].mxu0 %v43
    %v176 = vpop.f32.mrb[0].mxu0
    %v177 = vadd.f32 %v98, %v176
    %v178 = vpop.f32.mrb[0].mxu0
    %v179 = vadd.f32 %v102, %v178
    %180 = vmatprep.mubr.f32.mxu0 0.0
    %181 = vmatmul.mubr.f32.gmra.mrb[0].mxu0 %v44
    %v182 = vpop.f32.mrb[0].mxu0
    %v183 = vadd.f32 %v98, %v182
    %v184 = vpop.f32.mrb[0].mxu0
    %v185 = vadd.f32 %v102, %v184
    %186 = vdwg.mxu0
    %187 = vmatprep.subr.mxu0 0.0
    %188 = vmatpush1.msra.mxu0 %v47
    %189 = vmatprep.subr.mxu0 0.0
    %190 = vmatpush1.msra.mxu0 %v50
    %191 = vmatprep.subr.mxu0 0.0
    %192 = vmatpush1.msra.mxu0 %v53
    %193 = vmatprep.subr.mxu0 0.0
    %194 = vmatpush1.msra.mxu0 %v56
    %195 = vmatprep.subr.mxu0 0.0
    %196 = vmatpush1.msra.mxu0 %v59
    %197 = vmatprep.subr.mxu0 0.0
    %198 = vmatpush1.msra.mxu0 %v62
    %199 = vmatprep.subr.mxu0 0.0
    %200 = vmatpush1.msra.mxu0 %v65
    %201 = vmatprep.subr.mxu0 0.0
    %202 = vmatpush1.msra.mxu0 %v68
    %203 = vmatprep.subr.mxu0 0.0
    %204 = vmatpush1.msra.mxu0 %v71
    %205 = vmatprep.subr.mxu0 0.0
    %206 = vmatpush1.msra.mxu0 %v74
    %207 = vmatprep.subr.mxu0 0.0
    %208 = vmatpush1.msra.mxu0 %v77
    %209 = vmatprep.subr.mxu0 0.0
    %210 = vmatpush1.msra.mxu0 %v80
    %211 = vmatprep.subr.mxu0 0.0
    %212 = vmatpush1.msra.mxu0 %v83
    %213 = vmatprep.subr.mxu0 0.0
    %214 = vmatpush1.msra.mxu0 %v86
    %215 = vmatprep.subr.mxu0 0.0
    %216 = vmatpush1.msra.mxu0 %v89
    %217 = vmatprep.subr.mxu0 0.0
    %218 = vmatpush1.msra.mxu0 %v92
    %219 = vmatprep.subr.mxu0 0.0
    %220 = vmatpush1.msra.mxu0 0.0
    %221 = vmatprep.subr.mxu0 0.0
    %222 = vmatpush1.msra.mxu0 0.0
    %223 = vmatprep.subr.mxu0 0.0
    %224 = vmatpush1.msra.mxu0 0.0
    %225 = vmatprep.subr.mxu0 0.0
    %226 = vmatpush1.msra.mxu0 0.0
    %227 = vmatprep.subr.mxu0 0.0
    %228 = vmatpush1.msra.mxu0 0.0
    %229 = vmatprep.subr.mxu0 0.0
    %230 = vmatpush1.msra.mxu0 0.0
    %231 = vmatprep.subr.mxu0 0.0
    %232 = vmatpush1.msra.mxu0 0.0
    %233 = vmatprep.subr.mxu0 0.0
    %234 = vmatpush1.msra.mxu0 0.0
    %235 = vmatprep.subr.mxu0 0.0
    %236 = vmatpush1.msra.mxu0 0.0
    %237 = vmatprep.subr.mxu0 0.0
    %238 = vmatpush1.msra.mxu0 0.0
    %239 = vmatprep.subr.mxu0 0.0
    %240 = vmatpush1.msra.mxu0 0.0
    %241 = vmatprep.subr.mxu0 0.0
    %242 = vmatpush1.msra.mxu0 0.0
    %243 = vmatprep.subr.mxu0 0.0
    %244 = vmatpush1.msra.mxu0 0.0
    %245 = vmatprep.subr.mxu0 0.0
    %246 = vmatpush1.msra.mxu0 0.0
    %247 = vmatprep.subr.mxu0 0.0
    %248 = vmatpush1.msra.mxu0 0.0
    %249 = vmatprep.subr.mxu0 0.0
    %250 = vmatpush1.msra.mxu0 0.0
    %251 = vmatprep.mubr.f32.mxu0 0.0
    %252 = vmatmul.mubr.f32.gmra.mrb[0].mxu0 %v43
    %v253 = vpop.f32.mrb[0].mxu0
    %v254 = vadd.f32 %v106, %v253
    %v255 = vpop.f32.mrb[0].mxu0
    %256 = vmatprep.mubr.f32.mxu0 0.0
    %257 = vmatmul.mubr.f32.gmra.mrb[0].mxu0 %v44
    %v258 = vpop.f32.mrb[0].mxu0
    %v259 = vadd.f32 %v106, %v258
    %v260 = vpop.f32.mrb[0].mxu0
    %261 = vdwg.mxu0
    %262 = vst [vmem:[#allocation7] sm:$0xff] %v177
    %263 = vst [vmem:[#allocation7 + $0x8] sm:$0xff] %v179
    %264 = vst [vmem:[#allocation7 + $0x10] sm:$0xff] %v254
    %265 = vst [vmem:[#allocation7 + $0x18] sm:$0xff] %v183
    %266 = vst [vmem:[#allocation7 + $0x20] sm:$0xff] %v185
    %267 = vst [vmem:[#allocation7 + $0x28] sm:$0xff] %v259
    // Predicated region
    $region22: #{tpu_custom_call.1} parent=1 // pred_check
      _
    $region23: #{tpu_custom_call.1} parent=1 // pred_check_branch
      %269 = sbr.rel (0) target = $region25
    $region24: #{tpu_custom_call.1} parent=1 // pred_region
      %s271 = ssub.s32 768, 768
      %272 = vsyncadd [#allocation4], %s271
      %s273 = sshll.u32 [#allocation7], 4
      %s274 = int_to_ptr.vmem [resolvable:$true] %s273
      %279 = dma.vmem_to_hbm [thread:$0]  %s274, 768, %s3, [#allocation4], 384, 384, 24
    $region25: #{tpu_custom_call.1} parent=1 // pred_fallthru
      _
    // Predicated region
    $region26: #{tpu_custom_call.1} parent=1 // pred_check
      _
    $region27: #{tpu_custom_call.1} parent=1 // pred_check_branch
      %281 = sbr.rel (0) target = $region29
    $region28: #{tpu_custom_call.1} parent=1 // pred_region
      %282 = dma.done [#allocation4], 768
    $region29: #{tpu_custom_call.1} parent=1 // pred_fallthru
      _
    %283 = vsyncpa [#allocation3], 1
    %284 = vsyncpa [#allocation6], 1
    %285 = vsyncpa [#allocation4], 1

</llo_original>
